<compile_context>
chip_gen: v5e
topology: v5e:2x2
jax: 0.10.0
libtpu: 0.0.40
codegen_flags: <defaults>
</compile_context>

<pallas_src>
import math

import jax
import jax.numpy as jnp
from jax import lax
from jax.experimental import pallas as pl
from jax.experimental.pallas import tpu as pltpu

_VMEM_LIMIT = 64 * 1024 * 1024  # <= physical VMEM on v5e/v6e (128 MiB) and v7x (64 MiB)


def _pick_tile(dim, prefs):
    for t in prefs:
        if t <= dim and dim % t == 0:
            return t
    return dim


def _pick_group(nh, d, target=256):
    """Heads per matmul so the MXU N (or reduction) dimension is ~256 wide."""
    g = min(nh, max(1, target // max(d, 1)))
    while nh % g != 0:
        g -= 1
    return g


# -------------- fused head-major QKV projection (+ RoPE epilogue) --------------

def _make_proj_kernel(with_rope, hg, d):
    def body(x_ref, w_ref, cos_ref, sin_ref, o_ref, acc_ref):
        kt = pl.program_id(3)

        @pl.when(kt == 0)
        def _():
            acc_ref[...] = jnp.zeros_like(acc_ref)

        # bf16 x bf16 -> f32 accumulate on the MXU; Hg heads per pass.
        acc_ref[...] += jnp.dot(x_ref[...], w_ref[...],
                                preferred_element_type=jnp.float32)

        @pl.when(kt == pl.num_programs(3) - 1)
        def _():
            acc = acc_ref[...]
            if with_rope:
                cos = cos_ref[...]
                sin = sin_ref[...]
            for hi in range(hg):
                r = acc[:, hi * d:(hi + 1) * d]
                if with_rope:
                    # NeoX rotate-half RoPE fused into the projection epilogue.
                    rolled = jnp.concatenate([r[:, d // 2:], r[:, :d // 2]], axis=-1)
                    r = r * cos + rolled * sin
                o_ref[hi] = r.astype(o_ref.dtype)

    if with_rope:
        def kernel(x_ref, w_ref, cos_ref, sin_ref, o_ref, acc_ref):
            body(x_ref, w_ref, cos_ref, sin_ref, o_ref, acc_ref)
    else:
        def kernel(x_ref, w_ref, o_ref, acc_ref):
            body(x_ref, w_ref, None, None, o_ref, acc_ref)
    return kernel


def proj_heads(x, w_heads, cos_full, sin_signed, with_rope):
    """x: [B, S, K] (bf16); w_heads: [NH, K, D] (bf16) -> head-major [B, NH, S, D]."""
    B, S, K = x.shape
    NH, _, D = w_heads.shape
    Hg = _pick_group(NH, D)                      # heads per matmul (N = Hg*D)
    NG = NH // Hg
    w_g = (w_heads.reshape(NG, Hg, K, D)
                  .transpose(0, 2, 1, 3)
                  .reshape(NG, K, Hg * D))       # one-time weight re-layout
    ts = _pick_tile(S, (256, 128))
    tk = _pick_tile(K, (512, 256, 128))
    grid = (B, NG, S // ts, K // tk)

    in_specs = [
        pl.BlockSpec((None, ts, tk), lambda b, h, s, k: (b, s, k)),
        pl.BlockSpec((None, tk, Hg * D), lambda b, h, s, k: (h, k, 0)),
    ]
    ins = [x, w_g]
    if with_rope:
        in_specs += [
            pl.BlockSpec((ts, D), lambda b, h, s, k: (s, 0)),
            pl.BlockSpec((ts, D), lambda b, h, s, k: (s, 0)),
        ]
        ins += [cos_full, sin_signed]

    return pl.pallas_call(
        _make_proj_kernel(with_rope, Hg, D),
        grid=grid,
        in_specs=in_specs,
        out_specs=pl.BlockSpec((None, Hg, ts, D), lambda b, h, s, k: (b, h, s, 0)),
        out_shape=jax.ShapeDtypeStruct((B, NH, S, D), x.dtype),
        scratch_shapes=[pltpu.VMEM((ts, Hg * D), jnp.float32)],
        compiler_params=pltpu.CompilerParams(
            dimension_semantics=("parallel", "parallel", "parallel", "arbitrary"),
            vmem_limit_bytes=_VMEM_LIMIT),
    )(*ins)


# -------------- attention + KeyFormer Gumbel-softmax key score --------------

def _make_attn_kernel(S, tq, inv_norm, inv_tau):
    def kernel(q_ref, k_ref, v_ref, noise_ref, o_ref, kf_ref, kf_acc):
        g = pl.program_id(2)
        qt = pl.program_id(3)

        @pl.when(jnp.logical_and(g == 0, qt == 0))
        def _():
            kf_acc[...] = jnp.zeros_like(kf_acc)

        k = k_ref[...]                      # (S, D) bf16, resident across g/qt
        v = v_ref[...]                      # (S, D) bf16
        q = q_ref[...] * inv_norm           # (tq, D) bf16, 1/sqrt(D) folded in

        # Additive causal mask, computed once per grid step.
        row = qt * tq + lax.broadcasted_iota(jnp.int32, (tq, S), 0)
        col = lax.broadcasted_iota(jnp.int32, (tq, S), 1)
        neg = jnp.where(col <= row, 0.0, -1e30).astype(jnp.float32)

        # bf16 QK^T with f32 accumulation.
        scores = lax.dot_general(q, k, (((1,), (1,)), ((), ())),
                                 preferred_element_type=jnp.float32)   # (tq, S)

        # --- causal softmax attention (output path) ---
        masked = scores + neg
        m = jnp.max(masked, axis=-1, keepdims=True)
        p = jnp.exp(masked - m)
        l = jnp.sum(p, axis=-1, keepdims=True)
        ctx = jnp.dot(p.astype(v.dtype), v,
                      preferred_element_type=jnp.float32)              # (tq, D)
        o_ref[...] = (ctx / l).astype(o_ref.dtype)

        # --- KeyFormer Gumbel-softmax key score (noise precomputed outside) ---
        kf_logits = (scores + noise_ref[...]) * inv_tau + neg
        km = jnp.max(kf_logits, axis=-1, keepdims=True)
        kp = jnp.exp(kf_logits - km)
        kl = jnp.sum(kp, axis=-1, keepdims=True)
        kf_probs = kp / kl                  # exact reciprocal: feeds top-k selection
        kf_acc[...] += jnp.sum(kf_probs, axis=0, keepdims=True)        # (1, S)

        @pl.when(jnp.logical_and(g == pl.num_programs(2) - 1,
                                 qt == pl.num_programs(3) - 1))
        def _():
            kf_ref[...] = kf_acc[...]

    return kernel


def attention_core(q_h, k_h, v_h, gumbel, group_size, tau):
    """q_h: [B,H,S,D] (RoPE'd, bf16); k_h/v_h: [B,KVH,S,D]; gumbel: [B,H,S,S] f32."""
    B, H, S, D = q_h.shape
    KVH = k_h.shape[1]
    G = group_size
    q_g = q_h.reshape(B, KVH, G, S, D)          # contiguous split of H -> free
    n_g = gumbel.reshape(B, KVH, G, S, S)

    tq = _pick_tile(S, (128,))                  # 128 keeps (tq,S) temporaries small
    num_qt = S // tq
    inv_norm = 1.0 / math.sqrt(D)
    inv_tau = 1.0 / float(tau)

    # NOTE(v7x megacore): B*KVH parallel trips should be >= 2 to occupy both TCs.
    out, kf = pl.pallas_call(
        _make_attn_kernel(S, tq, inv_norm, inv_tau),
        grid=(B, KVH, G, num_qt),
        in_specs=[
            pl.BlockSpec((None, None, None, tq, D), lambda b, h, g, t: (b, h, g, t, 0)),
            pl.BlockSpec((None, None, S, D), lambda b, h, g, t: (b, h, 0, 0)),
            pl.BlockSpec((None, None, S, D), lambda b, h, g, t: (b, h, 0, 0)),
            pl.BlockSpec((None, None, None, tq, S), lambda b, h, g, t: (b, h, g, t, 0)),
        ],
        out_specs=(
            pl.BlockSpec((None, None, None, tq, D), lambda b, h, g, t: (b, h, g, t, 0)),
            pl.BlockSpec((None, None, 1, S), lambda b, h, g, t: (b, h, 0, 0)),
        ),
        out_shape=(
            jax.ShapeDtypeStruct((B, KVH, G, S, D), q_h.dtype),
            jax.ShapeDtypeStruct((B, KVH, 1, S), jnp.float32),
        ),
        scratch_shapes=[pltpu.VMEM((1, S), jnp.float32)],
        compiler_params=pltpu.CompilerParams(
            dimension_semantics=("parallel", "parallel", "arbitrary", "arbitrary"),
            vmem_limit_bytes=_VMEM_LIMIT),
    )(q_g, k_h, v_h, n_g)

    return out.reshape(B, H, S, D), kf[:, :, 0, :]


# ------------------------------ output projection ------------------------------

def _make_out_proj_kernel(hg):
    def kernel(x_ref, w_ref, o_ref, acc_ref):
        h = pl.program_id(3)

        @pl.when(h == 0)
        def _():
            acc_ref[...] = jnp.zeros_like(acc_ref)

        part = jnp.dot(x_ref[0], w_ref[0], preferred_element_type=jnp.float32)
        for i in range(1, hg):
            part += jnp.dot(x_ref[i], w_ref[i], preferred_element_type=jnp.float32)
        acc_ref[...] += part

        @pl.when(h == pl.num_programs(3) - 1)
        def _():
            o_ref[...] = acc_ref[...].astype(o_ref.dtype)

    return kernel


def out_projection(attn_h, w_out, out_dtype):
    """attn_h: head-major [B, H, S, D] (bf16); w_out: [H*D, N] (bf16) -> [B, S, N]."""
    B, H, S, D = attn_h.shape
    N = w_out.shape[1]
    w_h = w_out.reshape(H, D, N)
    Hg = _pick_group(H, D)                       # heads reduced per grid step
    ts = _pick_tile(S, (256, 128))
    tn = _pick_tile(N, (512, 256, 128))
    grid = (B, S // ts, N // tn, H // Hg)
    return pl.pallas_call(
        _make_out_proj_kernel(Hg),
        grid=grid,
        in_specs=[
            pl.BlockSpec((None, Hg, ts, D), lambda b, s, n, h: (b, h, s, 0)),
            pl.BlockSpec((Hg, D, tn), lambda b, s, n, h: (h, 0, n)),
        ],
        out_specs=pl.BlockSpec((None, ts, tn), lambda b, s, n, h: (b, s, n)),
        out_shape=jax.ShapeDtypeStruct((B, S, N), out_dtype),
        scratch_shapes=[pltpu.VMEM((ts, tn), jnp.float32)],
        compiler_params=pltpu.CompilerParams(
            dimension_semantics=("parallel", "parallel", "parallel", "arbitrary"),
            vmem_limit_bytes=_VMEM_LIMIT),
    )(attn_h, w_h)


# ------------------------------ JAX glue ------------------------------

def rope_cos_sin(S, D, base):
    half = D // 2
    inv_freq = 1.0 / (base ** (jnp.arange(0, half, dtype=jnp.float32) * 2.0 / D))
    pos = jnp.arange(S, dtype=jnp.float32)
    freqs = jnp.outer(pos, inv_freq)                     # [S, D/2]
    cos = jnp.cos(freqs)
    sin = jnp.sin(freqs)
    cos_full = jnp.concatenate([cos, cos], axis=-1)      # [S, D]
    sin_signed = jnp.concatenate([-sin, sin], axis=-1)   # [S, D]
    return cos_full, sin_signed


def attention_forward(x, w_qkv, w_out, cfg, kv_caches, seed=1234):
    B, S, hidden = x.shape
    H, KVH, D = cfg["head_num"], cfg["kv_head_num"], cfg["head_dim"]
    G = H // KVH
    kv_hidden = KVH * D
    in_dtype = x.dtype
    cdt = jnp.bfloat16                            # MXU-native input dtype; f32 acc

    # One-time weight-side head-major views (activations are never transposed).
    x_c = x.astype(cdt)
    w_q = w_qkv[:, :hidden].reshape(hidden, H, D).transpose(1, 0, 2).astype(cdt)
    w_k = (w_qkv[:, hidden:hidden + kv_hidden]
           .reshape(hidden, KVH, D).transpose(1, 0, 2).astype(cdt))
    w_v = (w_qkv[:, hidden + kv_hidden:]
           .reshape(hidden, KVH, D).transpose(1, 0, 2).astype(cdt))

    cos_full, sin_signed = rope_cos_sin(S, D, cfg["rotary_base"])

    # Projections with fused RoPE epilogue for q and k (rotated k feeds the cache,
    # matching rotary_embedding_online_cuda's in-place behaviour). v skips cos/sin.
    q_h = proj_heads(x_c, w_q, cos_full, sin_signed, with_rope=True)   # [B, H, S, D]
    k_h = proj_heads(x_c, w_k, cos_full, sin_signed, with_rope=True)   # [B, KVH, S, D]
    v_h = proj_heads(x_c, w_v, None, None, with_rope=False)            # [B, KVH, S, D]

    # Gumbel noise precomputed in plain JAX (the reference streams an exp_rand
    # uniform(1e-8, 1) tensor of the same shape); pltpu.prng_* has no CPU/interpret
    # lowering, and this also moves 2 of 4 transcendentals out of the kernel.
    key = jax.random.PRNGKey(seed)
    u = jax.random.uniform(key, (B, H, S, S), jnp.float32, minval=1e-8, maxval=1.0)
    gumbel = -jnp.log(-jnp.log(u))

    out_h, kf_score = attention_core(q_h, k_h, v_h, gumbel, G, cfg["tau"])

    # KV-cache selection (top-k + sorted gather) stays in plain JAX.
    budget = cfg["cache_budget"]
    _, sel = jax.lax.top_k(kf_score, budget)             # [B, KVH, budget]
    sel = jnp.sort(sel, axis=-1)
    idx = jnp.broadcast_to(sel[..., None], (B, KVH, budget, D))
    k_sel = jnp.take_along_axis(k_h, idx, axis=2).astype(in_dtype)
    v_sel = jnp.take_along_axis(v_h, idx, axis=2).astype(in_dtype)
    kv_cache = jnp.stack(
        [jnp.transpose(k_sel, (0, 2, 1, 3)), jnp.transpose(v_sel, (0, 2, 1, 3))],
        axis=1)                                          # [B, 2, budget, KVH, D]
    kv_caches.append((kf_score, kv_cache))

    # Output projection directly from the head-major attention output.
    out = out_projection(out_h, w_out.astype(cdt), in_dtype)   # [B, S, hidden]
    return out, kv_caches


# ------------------------------ main ------------------------------

if __name__ == "__main__":
    B, S = 2, 8
    hidden = 32
    H, KVH = 4, 2
    D = hidden // H                    # 8
    cfg = dict(
        head_num=H,
        kv_head_num=KVH,
        head_dim=D,
        cache_budget=4,
        tau=2.0,
        rotary_base=10000.0,
    )

    key = jax.random.PRNGKey(0)
    k1, k2, k3 = jax.random.split(key, 3)
    x = jax.random.normal(k1, (B, S, hidden), jnp.float32)
    w_qkv = 0.05 * jax.random.normal(k2, (hidden, hidden + 2 * KVH * D), jnp.float32)
    w_out = 0.05 * jax.random.normal(k3, (hidden, hidden), jnp.float32)

    kv_caches = []
    out, kv_caches = attention_forward(x, w_qkv, w_out, cfg, kv_caches, seed=1234)
    jax.block_until_ready(out)
    jax.block_until_ready(kv_caches[0][0])
    jax.block_until_ready(kv_caches[0][1])

    assert out.shape == (B, S, hidden)
    assert kv_caches[0][0].shape == (B, KVH, S)
    assert kv_caches[0][1].shape == (B, 2, cfg["cache_budget"], KVH, D)
    print("KERNEL_OK")
</pallas_src>

<mosaic_0001>
module attributes {stable_mosaic.version = 11 : i64} {
  func.func @kernel(%arg0: i32, %arg1: i32, %arg2: i32, %arg3: i32, %arg4: memref<1x8x32xbf16, #tpu.memory_space<vmem>>, %arg5: memref<1x32x32xbf16, #tpu.memory_space<vmem>>, %arg6: memref<8x8xf32, #tpu.memory_space<vmem>>, %arg7: memref<8x8xf32, #tpu.memory_space<vmem>>, %arg8: memref<1x4x8x8xbf16, #tpu.memory_space<vmem>>, %arg9: memref<8x32xf32, #tpu.memory_space<vmem>>) attributes {dimension_semantics = [#tpu.dimension_semantics<parallel>, #tpu.dimension_semantics<parallel>, #tpu.dimension_semantics<parallel>, #tpu.dimension_semantics<arbitrary>], iteration_bounds = array<i64: 2, 1, 1, 1>, scalar_prefetch = 0 : i64, scratch_operands = 1 : i64, tpu.core_type = #tpu.core_type<tc>, window_params = [{transform_indices = @transform_0, window_bounds = array<i64: 1, 8, 32>}, {transform_indices = @transform_1, window_bounds = array<i64: 1, 32, 32>}, {transform_indices = @transform_2, window_bounds = array<i64: 8, 8>}, {transform_indices = @transform_3, window_bounds = array<i64: 8, 8>}, {transform_indices = @transform_4, window_bounds = array<i64: 1, 4, 8, 8>}]} {
    %c0_i32 = arith.constant 0 : i32
    %0 = arith.cmpi eq, %arg3, %c0_i32 : i32
    %1 = arith.extui %0 : i1 to i32
    %c0_i32_0 = arith.constant 0 : i32
    %2 = arith.cmpi ne, %1, %c0_i32_0 : i32
    scf.if %2 {
      %cst_12 = arith.constant 0.000000e+00 : f32
      %14 = vector.broadcast %cst_12 : f32 to vector<8x32xf32>
      %c0_13 = arith.constant 0 : index
      %c0_14 = arith.constant 0 : index
      %15 = vector.load %arg9[%c0_13, %c0_14] : memref<8x32xf32, #tpu.memory_space<vmem>>, vector<8x32xf32>
      tpu.vector_store %arg9[%c0_13, %c0_14], %14 {strides = array<i32>} : memref<8x32xf32, #tpu.memory_space<vmem>>, vector<8x32xf32>,
    } else {
    }
    %c0 = arith.constant 0 : index
    %c0_1 = arith.constant 0 : index
    %3 = vector.load %arg9[%c0, %c0_1] : memref<8x32xf32, #tpu.memory_space<vmem>>, vector<8x32xf32>
    %c0_2 = arith.constant 0 : index
    %c0_3 = arith.constant 0 : index
    %c0_4 = arith.constant 0 : index
    %4 = vector.load %arg4[%c0_2, %c0_3, %c0_4] : memref<1x8x32xbf16, #tpu.memory_space<vmem>>, vector<1x8x32xbf16>
    %5 = vector.shape_cast %4 : vector<1x8x32xbf16> to vector<8x32xbf16>
    %c0_5 = arith.constant 0 : index
    %c0_6 = arith.constant 0 : index
    %c0_7 = arith.constant 0 : index
    %6 = vector.load %arg5[%c0_5, %c0_6, %c0_7] : memref<1x32x32xbf16, #tpu.memory_space<vmem>>, vector<1x32x32xbf16>
    %7 = vector.shape_cast %6 : vector<1x32x32xbf16> to vector<32x32xbf16>
    %cst = arith.constant dense<0.000000e+00> : vector<8x32xf32>
    %8 = tpu.matmul %5, %7, %cst {dimension_numbers = #tpu.dot_dimension_numbers<[1], [0], [0], [1], [0, 0, 1, 1], [], []>} : vector<8x32xbf16>, vector<32x32xbf16>, vector<8x32xf32> -> vector<8x32xf32>
    %9 = arith.addf %3, %8 : vector<8x32xf32>
    %c0_8 = arith.constant 0 : index
    %c0_9 = arith.constant 0 : index
    %10 = vector.load %arg9[%c0_8, %c0_9] : memref<8x32xf32, #tpu.memory_space<vmem>>, vector<8x32xf32>
    tpu.vector_store %arg9[%c0_8, %c0_9], %9 {strides = array<i32>} : memref<8x32xf32, #tpu.memory_space<vmem>>, vector<8x32xf32>,
    %c0_i32_10 = arith.constant 0 : i32
    %11 = arith.cmpi eq, %arg3, %c0_i32_10 : i32
    %12 = arith.extui %11 : i1 to i32
    %c0_i32_11 = arith.constant 0 : i32
    %13 = arith.cmpi ne, %12, %c0_i32_11 : i32
    scf.if %13 {
      %c0_12 = arith.constant 0 : index
      %c0_13 = arith.constant 0 : index
      %14 = vector.load %arg9[%c0_12, %c0_13] : memref<8x32xf32, #tpu.memory_space<vmem>>, vector<8x32xf32>
      %c0_14 = arith.constant 0 : index
      %c0_15 = arith.constant 0 : index
      %15 = vector.load %arg6[%c0_14, %c0_15] : memref<8x8xf32, #tpu.memory_space<vmem>>, vector<8x8xf32>
      %c0_16 = arith.constant 0 : index
      %c0_17 = arith.constant 0 : index
      %16 = vector.load %arg7[%c0_16, %c0_17] : memref<8x8xf32, #tpu.memory_space<vmem>>, vector<8x8xf32>
      %17 = vector.extract_strided_slice %14 {offsets = [0, 0], sizes = [8, 8], strides = [1, 1]} : vector<8x32xf32> to vector<8x8xf32>
      %18 = vector.extract_strided_slice %17 {offsets = [0, 4], sizes = [8, 4], strides = [1, 1]} : vector<8x8xf32> to vector<8x4xf32>
      %19 = vector.extract_strided_slice %17 {offsets = [0, 0], sizes = [8, 4], strides = [1, 1]} : vector<8x8xf32> to vector<8x4xf32>
      %20 = tpu.concatenate %18, %19 in 1 : vector<8x4xf32>, vector<8x4xf32> -> vector<8x8xf32>
      %21 = arith.mulf %17, %15 : vector<8x8xf32>
      %22 = arith.mulf %20, %16 : vector<8x8xf32>
      %23 = arith.addf %21, %22 : vector<8x8xf32>
      %24 = arith.truncf %23 : vector<8x8xf32> to vector<8x8xbf16>
      %c0_18 = arith.constant 0 : index
      %c0_19 = arith.constant 0 : index
      %c0_20 = arith.constant 0 : index
      %c0_21 = arith.constant 0 : index
      %25 = vector.load %arg8[%c0_18, %c0_19, %c0_20, %c0_21] : memref<1x4x8x8xbf16, #tpu.memory_space<vmem>>, vector<1x1x8x8xbf16>
      %26 = vector.shape_cast %25 : vector<1x1x8x8xbf16> to vector<8x8xbf16>
      %27 = vector.shape_cast %24 : vector<8x8xbf16> to vector<1x1x8x8xbf16>
      tpu.vector_store %arg8[%c0_18, %c0_19, %c0_20, %c0_21], %27 {strides = array<i32>} : memref<1x4x8x8xbf16, #tpu.memory_space<vmem>>, vector<1x1x8x8xbf16>,
      %28 = vector.extract_strided_slice %14 {offsets = [0, 8], sizes = [8, 8], strides = [1, 1]} : vector<8x32xf32> to vector<8x8xf32>
      %29 = vector.extract_strided_slice %28 {offsets = [0, 4], sizes = [8, 4], strides = [1, 1]} : vector<8x8xf32> to vector<8x4xf32>
      %30 = vector.extract_strided_slice %28 {offsets = [0, 0], sizes = [8, 4], strides = [1, 1]} : vector<8x8xf32> to vector<8x4xf32>
      %31 = tpu.concatenate %29, %30 in 1 : vector<8x4xf32>, vector<8x4xf32> -> vector<8x8xf32>
      %32 = arith.mulf %28, %15 : vector<8x8xf32>
      %33 = arith.mulf %31, %16 : vector<8x8xf32>
      %34 = arith.addf %32, %33 : vector<8x8xf32>
      %35 = arith.truncf %34 : vector<8x8xf32> to vector<8x8xbf16>
      %c0_22 = arith.constant 0 : index
      %c1 = arith.constant 1 : index
      %c0_23 = arith.constant 0 : index
      %c0_24 = arith.constant 0 : index
      %36 = vector.load %arg8[%c0_22, %c1, %c0_23, %c0_24] : memref<1x4x8x8xbf16, #tpu.memory_space<vmem>>, vector<1x1x8x8xbf16>
      %37 = vector.shape_cast %36 : vector<1x1x8x8xbf16> to vector<8x8xbf16>
      %38 = vector.shape_cast %35 : vector<8x8xbf16> to vector<1x1x8x8xbf16>
      tpu.vector_store %arg8[%c0_22, %c1, %c0_23, %c0_24], %38 {strides = array<i32>} : memref<1x4x8x8xbf16, #tpu.memory_space<vmem>>, vector<1x1x8x8xbf16>,
      %39 = vector.extract_strided_slice %14 {offsets = [0, 16], sizes = [8, 8], strides = [1, 1]} : vector<8x32xf32> to vector<8x8xf32>
      %40 = vector.extract_strided_slice %39 {offsets = [0, 4], sizes = [8, 4], strides = [1, 1]} : vector<8x8xf32> to vector<8x4xf32>
      %41 = vector.extract_strided_slice %39 {offsets = [0, 0], sizes = [8, 4], strides = [1, 1]} : vector<8x8xf32> to vector<8x4xf32>
      %42 = tpu.concatenate %40, %41 in 1 : vector<8x4xf32>, vector<8x4xf32> -> vector<8x8xf32>
      %43 = arith.mulf %39, %15 : vector<8x8xf32>
      %44 = arith.mulf %42, %16 : vector<8x8xf32>
      %45 = arith.addf %43, %44 : vector<8x8xf32>
      %46 = arith.truncf %45 : vector<8x8xf32> to vector<8x8xbf16>
      %c0_25 = arith.constant 0 : index
      %c2 = arith.constant 2 : index
      %c0_26 = arith.constant 0 : index
      %c0_27 = arith.constant 0 : index
      %47 = vector.load %arg8[%c0_25, %c2, %c0_26, %c0_27] : memref<1x4x8x8xbf16, #tpu.memory_space<vmem>>, vector<1x1x8x8xbf16>
      %48 = vector.shape_cast %47 : vector<1x1x8x8xbf16> to vector<8x8xbf16>
      %49 = vector.shape_cast %46 : vector<8x8xbf16> to vector<1x1x8x8xbf16>
      tpu.vector_store %arg8[%c0_25, %c2, %c0_26, %c0_27], %49 {strides = array<i32>} : memref<1x4x8x8xbf16, #tpu.memory_space<vmem>>, vector<1x1x8x8xbf16>,
      %50 = vector.extract_strided_slice %14 {offsets = [0, 24], sizes = [8, 8], strides = [1, 1]} : vector<8x32xf32> to vector<8x8xf32>
      %51 = vector.extract_strided_slice %50 {offsets = [0, 4], sizes = [8, 4], strides = [1, 1]} : vector<8x8xf32> to vector<8x4xf32>
      %52 = vector.extract_strided_slice %50 {offsets = [0, 0], sizes = [8, 4], strides = [1, 1]} : vector<8x8xf32> to vector<8x4xf32>
      %53 = tpu.concatenate %51, %52 in 1 : vector<8x4xf32>, vector<8x4xf32> -> vector<8x8xf32>
      %54 = arith.mulf %50, %15 : vector<8x8xf32>
      %55 = arith.mulf %53, %16 : vector<8x8xf32>
      %56 = arith.addf %54, %55 : vector<8x8xf32>
      %57 = arith.truncf %56 : vector<8x8xf32> to vector<8x8xbf16>
      %c0_28 = arith.constant 0 : index
      %c3 = arith.constant 3 : index
      %c0_29 = arith.constant 0 : index
      %c0_30 = arith.constant 0 : index
      %58 = vector.load %arg8[%c0_28, %c3, %c0_29, %c0_30] : memref<1x4x8x8xbf16, #tpu.memory_space<vmem>>, vector<1x1x8x8xbf16>
      %59 = vector.shape_cast %58 : vector<1x1x8x8xbf16> to vector<8x8xbf16>
      %60 = vector.shape_cast %57 : vector<8x8xbf16> to vector<1x1x8x8xbf16>
      tpu.vector_store %arg8[%c0_28, %c3, %c0_29, %c0_30], %60 {strides = array<i32>} : memref<1x4x8x8xbf16, #tpu.memory_space<vmem>>, vector<1x1x8x8xbf16>,
    } else {
    }
    return
  }
  func.func @transform_0(%arg0: i32, %arg1: i32, %arg2: i32, %arg3: i32) -> (i32, i32, i32) {
    %c0_i32 = arith.constant 0 : i32
    return %arg0, %arg2, %arg3 : i32, i32, i32
  }
  func.func @transform_1(%arg0: i32, %arg1: i32, %arg2: i32, %arg3: i32) -> (i32, i32, i32) {
    %c0_i32 = arith.constant 0 : i32
    %c0_i32_0 = arith.constant 0 : i32
    return %arg1, %arg3, %c0_i32 : i32, i32, i32
  }
  func.func @transform_2(%arg0: i32, %arg1: i32, %arg2: i32, %arg3: i32) -> (i32, i32) {
    %c0_i32 = arith.constant 0 : i32
    %c0_i32_0 = arith.constant 0 : i32
    return %arg2, %c0_i32 : i32, i32
  }
  func.func @transform_3(%arg0: i32, %arg1: i32, %arg2: i32, %arg3: i32) -> (i32, i32) {
    %c0_i32 = arith.constant 0 : i32
    %c0_i32_0 = arith.constant 0 : i32
    return %arg2, %c0_i32 : i32, i32
  }
  func.func @transform_4(%arg0: i32, %arg1: i32, %arg2: i32, %arg3: i32) -> (i32, i32, i32, i32) {
    %c0_i32 = arith.constant 0 : i32
    %c0_i32_0 = arith.constant 0 : i32
    return %arg0, %arg1, %arg2, %c0_i32 : i32, i32, i32, i32
  }
}

</mosaic_0001>

<llo_original>
// kernel: tpu_custom_call.1
$region0: #{tpu_custom_call.1}
  #allocation0 [shape = 'u32[]', space=smem, size = 0x4, offset = 0x4, fixed_abs, tag = 'smem constant byte address 0x4 - core index']
  #allocation1 [shape = 'u32[72,128]{1,0:T(1,128)}', space=vmem, size = 0x9000, scoped, tag = 'internal scratch']
  #allocation2 [shape = 'f32[8,32]{1,0:T(8,128)}', space=vmem, size = 0x1000, scoped, tag = 'scratch operand']
  %s0 = inlined_call_operand.hbm [shape: bf16[2,8,32], index: 0, kind: input, shape index: {}]
  %s1 = inlined_call_operand.hbm [shape: bf16[1,32,32], index: 1, kind: input, shape index: {}]
  %s2 = inlined_call_operand.hbm [shape: f32[8,8], index: 2, kind: input, shape index: {}]
  %s3 = inlined_call_operand.hbm [shape: f32[8,8], index: 3, kind: input, shape index: {}]
  %s4 = inlined_call_operand.hbm [shape: bf16[2,4,8,8], index: 4, kind: output, shape index: {}]
  %s5 = sld [smem:[#allocation0]]
  $region73: #{tpu_custom_call.1} parent=0
    _
  %s7 = ssub.s32 1, %s5
  %s8 = scalar_select 0, %s7, %s5
  $region1: #{tpu_custom_call.1} parent=0
    #allocation3 [shape = 'u8[4096]{0}', space=vmem, size = 0x1000, scoped, tag = 'input window, operand 0']
    #allocation4 [shape = 's32[2]{0}', space=sflag, size = 0x8, scoped, tag = 'scoped memory for tpu_custom_call.1']
    #allocation5 [shape = 's32[2]{0}', space=sflag, size = 0x8, scoped, tag = 'scoped memory for tpu_custom_call.1']
    #allocation6 [shape = 'u8[8192]{0}', space=vmem, size = 0x2000, scoped, tag = 'input window, operand 1, single buffered']
    #allocation7 [shape = 's32[1]{0}', space=sflag, size = 0x4, scoped, tag = 'scoped memory for tpu_custom_call.1']
    #allocation8 [shape = 'u8[4096]{0}', space=vmem, size = 0x1000, scoped, tag = 'input window, operand 2, single buffered']
    #allocation9 [shape = 'u8[4096]{0}', space=vmem, size = 0x1000, scoped, tag = 'input window, operand 3, single buffered']
    #allocation10 [shape = 's32[1]{0}', space=sflag, size = 0x4, scoped, tag = 'scoped memory for tpu_custom_call.1']
    #allocation11 [shape = 'u8[16384]{0}', space=vmem, size = 0x4000, scoped, tag = 'output window, operand 0']
    %9 = vsyncpa [#allocation4], 0
    %s10 = scalar_lea.sflag [#allocation4], 1
    %11 = vsyncpa %s10, 0
    %12 = vsyncpa [#allocation7], 0
    %13 = vsyncpa [#allocation10], 0
    %14 = vsyncpa [#allocation5], 0
    %s15 = scalar_lea.sflag [#allocation5], 1
    %16 = vsyncpa %s15, 0
    loop: start=0, step=1, limit=4
    $region2: #{tpu_custom_call.1} parent=1 // loop_pre_header
      _
    $region3: #{tpu_custom_call.1} parent=1 // loop_header
      %s18 = sphi 0, %s22
      %p19 = scmp.ge.s32.totalorder %s18, 4
      %s25 = sphi 0, %s51
      %s26 = sphi 0, %s47
      %s27 = sphi 0, %s43
      %s28 = sphi 0, %s39
      %s29 = sphi 0, %s25
      %s30 = sphi 0, %s26
      %s31 = sphi 0, %s27
      %s32 = sphi 0, %s28
      %s33 = sphi 0, %s29
      %s34 = sphi 0, %s30
      %s35 = sphi 0, %s31
      %s36 = sphi 0, %s32
      %s58 = sphi 0, %s60
      %s61 = sphi 0, %s58
      %s62 = sphi 0, %s61
      %s78 = sphi 0, %s62
      %s86 = sphi 0, %s88
      %s89 = sphi 0, %s86
      %s90 = sphi 0, %s89
      %s106 = sphi 0, %s90
      %s112 = sphi 0, %s114
      %s115 = sphi 0, %s112
      %s116 = sphi 0, %s115
      %s132 = sphi 0, %s116
      %s138 = sphi 0, %s140
      %s141 = sphi 0, %s138
      %s142 = sphi 0, %s141
      %s158 = sphi 0, %s142
      %s168 = sphi 0, %s170
      %s171 = sphi 0, %s168
      %s172 = sphi 0, %s171
      %s188 = sphi 0, %s172
    $region4: #{tpu_custom_call.1} parent=1 // loop_header_branch
      %21 = sbr.rel (%p19) target = $region8
    $region5: #{tpu_custom_call.1} parent=1 // loop_body
      %s23 = ssub.s32 %s18, 1
      %s24 = ssub.s32 %s18, 2
      %s37 = sadd.s32 1, %s28
      %p38 = scmp.ge.s32.totalorder %s37, 1
      %s39 = scalar_select %p38, 0, %s37
      %s40 = sadd.s32 1, %s27
      %s41 = scalar_select %p38, %s40, %s27
      %p42 = scmp.ge.s32.totalorder %s41, 1
      %s43 = scalar_select %p42, 0, %s41
      %s44 = sadd.s32 1, %s26
      %s45 = scalar_select %p42, %s44, %s26
      %p46 = scmp.ge.s32.totalorder %s45, 1
      %s47 = scalar_select %p46, 0, %s45
      %s48 = sadd.s32 1, %s25
      %s49 = scalar_select %p46, %s48, %s25
      %p50 = scmp.ge.s32.totalorder %s49, 2
      %s51 = scalar_select %p50, 0, %s49
      %s52 = ssub.s32 %s25, %s51
      %s53 = ssub.s32 %s27, %s43
      %s54 = sor.u32 %s52, %s53
      %s55 = ssub.s32 %s28, %s39
      %s56 = sor.u32 %s54, %s55
      %p57 = scmp.eq.s32.totalorder %s56, 0
      %s59 = sadd.s32 %s58, 1
      %s60 = scalar_select %p57, %s58, %s59
      %p63 = pneg %p57
      %p64 = scmp.eq.s32.totalorder %s18, 1
      %p65 = por %p63, %p64
      %p66 = scmp.ne.s32.totalorder %s58, %s61
      %p67 = scmp.eq.s32.totalorder %s18, 0
      %p68 = por %p66, %p67
      %p69 = scmp.ne.s32.totalorder %s58, %s61
      %p70 = scmp.eq.s32.totalorder %s23, 1
      %p71 = por %p69, %p70
      %p72 = scmp.ne.s32.totalorder %s61, %s62
      %p73 = scmp.eq.s32.totalorder %s23, 0
      %p74 = por %p72, %p73
      %p75 = scmp.ne.s32.totalorder %s61, %s62
      %p76 = scmp.eq.s32.totalorder %s24, 1
      %p77 = por %p75, %p76
      %p79 = scmp.ne.s32.totalorder %s62, %s78
      %p80 = scmp.eq.s32.totalorder %s24, 0
      %p81 = por %p79, %p80
      %s82 = ssub.s32 %s26, %s47
      %s83 = ssub.s32 %s28, %s39
      %s84 = sor.u32 %s82, %s83
      %p85 = scmp.eq.s32.totalorder %s84, 0
      %s87 = sadd.s32 %s86, 1
      %s88 = scalar_select %p85, %s86, %s87
      %p91 = pneg %p85
      %p92 = scmp.eq.s32.totalorder %s18, 1
      %p93 = por %p91, %p92
      %p94 = scmp.ne.s32.totalorder %s86, %s89
      %p95 = scmp.eq.s32.totalorder %s18, 0
      %p96 = por %p94, %p95
      %p97 = scmp.ne.s32.totalorder %s86, %s89
      %p98 = scmp.eq.s32.totalorder %s23, 1
      %p99 = por %p97, %p98
      %p100 = scmp.ne.s32.totalorder %s89, %s90
      %p101 = scmp.eq.s32.totalorder %s23, 0
      %p102 = por %p100, %p101
      %p103 = scmp.ne.s32.totalorder %s89, %s90
      %p104 = scmp.eq.s32.totalorder %s24, 1
      %p105 = por %p103, %p104
      %p107 = scmp.ne.s32.totalorder %s90, %s106
      %p108 = scmp.eq.s32.totalorder %s24, 0
      %p109 = por %p107, %p108
      %s110 = ssub.s32 %s27, %s43
      %p111 = scmp.eq.s32.totalorder %s110, 0
      %s113 = sadd.s32 %s112, 1
      %s114 = scalar_select %p111, %s112, %s113
      %p117 = pneg %p111
      %p118 = scmp.eq.s32.totalorder %s18, 1
      %p119 = por %p117, %p118
      %p120 = scmp.ne.s32.totalorder %s112, %s115
      %p121 = scmp.eq.s32.totalorder %s18, 0
      %p122 = por %p120, %p121
      %p123 = scmp.ne.s32.totalorder %s112, %s115
      %p124 = scmp.eq.s32.totalorder %s23, 1
      %p125 = por %p123, %p124
      %p126 = scmp.ne.s32.totalorder %s115, %s116
      %p127 = scmp.eq.s32.totalorder %s23, 0
      %p128 = por %p126, %p127
      %p129 = scmp.ne.s32.totalorder %s115, %s116
      %p130 = scmp.eq.s32.totalorder %s24, 1
      %p131 = por %p129, %p130
      %p133 = scmp.ne.s32.totalorder %s116, %s132
      %p134 = scmp.eq.s32.totalorder %s24, 0
      %p135 = por %p133, %p134
      %s136 = ssub.s32 %s27, %s43
      %p137 = scmp.eq.s32.totalorder %s136, 0
      %s139 = sadd.s32 %s138, 1
      %s140 = scalar_select %p137, %s138, %s139
      %p143 = pneg %p137
      %p144 = scmp.eq.s32.totalorder %s18, 1
      %p145 = por %p143, %p144
      %p146 = scmp.ne.s32.totalorder %s138, %s141
      %p147 = scmp.eq.s32.totalorder %s18, 0
      %p148 = por %p146, %p147
      %p149 = scmp.ne.s32.totalorder %s138, %s141
      %p150 = scmp.eq.s32.totalorder %s23, 1
      %p151 = por %p149, %p150
      %p152 = scmp.ne.s32.totalorder %s141, %s142
      %p153 = scmp.eq.s32.totalorder %s23, 0
      %p154 = por %p152, %p153
      %p155 = scmp.ne.s32.totalorder %s141, %s142
      %p156 = scmp.eq.s32.totalorder %s24, 1
      %p157 = por %p155, %p156
      %p159 = scmp.ne.s32.totalorder %s142, %s158
      %p160 = scmp.eq.s32.totalorder %s24, 0
      %p161 = por %p159, %p160
      %s162 = ssub.s32 %s25, %s51
      %s163 = ssub.s32 %s26, %s47
      %s164 = sor.u32 %s162, %s163
      %s165 = ssub.s32 %s27, %s43
      %s166 = sor.u32 %s164, %s165
      %p167 = scmp.eq.s32.totalorder %s166, 0
      %s169 = sadd.s32 %s168, 1
      %s170 = scalar_select %p167, %s168, %s169
      %p173 = pneg %p167
      %p174 = scmp.eq.s32.totalorder %s18, 1
      %p175 = por %p173, %p174
      %p176 = scmp.ne.s32.totalorder %s168, %s171
      %p177 = scmp.eq.s32.totalorder %s18, 0
      %p178 = por %p176, %p177
      %p179 = scmp.ne.s32.totalorder %s168, %s171
      %p180 = scmp.eq.s32.totalorder %s23, 1
      %p181 = por %p179, %p180
      %p182 = scmp.ne.s32.totalorder %s171, %s172
      %p183 = scmp.eq.s32.totalorder %s23, 0
      %p184 = por %p182, %p183
      %p185 = scmp.ne.s32.totalorder %s171, %s172
      %p186 = scmp.eq.s32.totalorder %s24, 1
      %p187 = por %p185, %p186
      %p189 = scmp.ne.s32.totalorder %s172, %s188
      %p190 = scmp.eq.s32.totalorder %s24, 0
      %p191 = por %p189, %p190
      %p192 = scmp.le.s32.totalorder 1, %s18
      %p193 = scmp.lt.s32.totalorder %s18, 3
      %p194 = pnand %p192, %p193
      %p195 = pneg %p194
      // Predicated region
      $region9: #{tpu_custom_call.1} parent=5 // pred_check
        _
      $region10: #{tpu_custom_call.1} parent=5 // pred_check_branch
        %197 = sbr.rel (%p194) target = $region12
      $region11: #{tpu_custom_call.1} parent=5 // pred_region
        %s198 = ssub.s32 %s18, 1
        // Predicated region
        $region13: #{tpu_custom_call.1} parent=11 // pred_check
          %p199 = pneg %p102
        $region14: #{tpu_custom_call.1} parent=11 // pred_check_branch
          %201 = sbr.rel (%p199) target = $region16
        $region15: #{tpu_custom_call.1} parent=11 // pred_region
          %s202 = smul.u32 4, %s32
          %204 = vsyncadd [#allocation7], 0
          %s205 = smul.addr %s30, 4
          %s206 = sadd.s32 %s202, %s205
          %s207 = smul.addr %s206, 4
          %s208 = scalar_lea.hbm %s1, %s207
          %s209 = sshll.u32 %s208, 4
          %s210 = int_to_ptr.hbm [resolvable:$true] %s209
          %s211 = sshll.u32 [#allocation6], 4
          %s212 = int_to_ptr.vmem [resolvable:$true] %s211
          %217 = dma.hbm_to_vmem [thread:$0]  %s210, 256, %s212, [#allocation7], 64, 64, 4
        $region16: #{tpu_custom_call.1} parent=11 // pred_fallthru
          _
        // Predicated region
        $region17: #{tpu_custom_call.1} parent=11 // pred_check
          %p218 = pneg %p128
        $region18: #{tpu_custom_call.1} parent=11 // pred_check_branch
          %220 = sbr.rel (%p218) target = $region20
        $region19: #{tpu_custom_call.1} parent=11 // pred_region
          %222 = vsyncadd [#allocation7], 0
          %s223 = smul.addr %s31, 8
          %s224 = scalar_lea.hbm %s2, %s223
          %s226 = sshll.u32 %s224, 4
          %s227 = int_to_ptr.hbm [resolvable:$true] %s226
          %s228 = sshll.u32 [#allocation8], 4
          %s229 = int_to_ptr.vmem [resolvable:$true] %s228
          %231 = dma.hbm_to_vmem [thread:$0]  %s227, 128, %s229, [#allocation7]
        $region20: #{tpu_custom_call.1} parent=11 // pred_fallthru
          _
        // Predicated region
        $region21: #{tpu_custom_call.1} parent=11 // pred_check
          %p232 = pneg %p154
        $region22: #{tpu_custom_call.1} parent=11 // pred_check_branch
          %234 = sbr.rel (%p232) target = $region24
        $region23: #{tpu_custom_call.1} parent=11 // pred_region
          %236 = vsyncadd [#allocation10], 0
          %s237 = smul.addr %s31, 8
          %s238 = scalar_lea.hbm %s3, %s237
          %s240 = sshll.u32 %s238, 4
          %s241 = int_to_ptr.hbm [resolvable:$true] %s240
          %s242 = sshll.u32 [#allocation9], 4
          %s243 = int_to_ptr.vmem [resolvable:$true] %s242
          %245 = dma.hbm_to_vmem [thread:$0]  %s241, 128, %s243, [#allocation10]
        $region24: #{tpu_custom_call.1} parent=11 // pred_fallthru
          _
      $region12: #{tpu_custom_call.1} parent=5 // pred_fallthru
        _
      %p246 = scmp.lt.s32.totalorder %s18, 2
      // Predicated region
      $region25: #{tpu_custom_call.1} parent=5 // pred_check
        %p247 = pneg %p246
      $region26: #{tpu_custom_call.1} parent=5 // pred_check_branch
        %249 = sbr.rel (%p247) target = $region28
      $region27: #{tpu_custom_call.1} parent=5 // pred_region
        // Predicated region
        $region29: #{tpu_custom_call.1} parent=27 // pred_check
          %p250 = pneg %p68
        $region30: #{tpu_custom_call.1} parent=27 // pred_check_branch
          %252 = sbr.rel (%p250) target = $region32
        $region31: #{tpu_custom_call.1} parent=27 // pred_region
          %s253 = sand.u32 %s58, 1
          %s254 = scalar_lea.sflag [#allocation4], %s253
          %s255 = sand.u32 %s58, 1
          %s256 = smul.addr %s255, 4
          %s257 = scalar_lea.vmem [#allocation3], %s256
          %259 = vsyncadd %s254, 0
          %s260 = sadd.s32 %s28, %s27
          %s261 = sadd.s32 %s260, %s25
          %s262 = smul.addr %s261, 4
          %s263 = scalar_lea.hbm %s0, %s262
          %s265 = sshll.u32 %s263, 4
          %s266 = int_to_ptr.hbm [resolvable:$true] %s265
          %s267 = sshll.u32 %s257, 4
          %s268 = int_to_ptr.vmem [resolvable:$true] %s267
          %270 = dma.hbm_to_vmem [thread:$0]  %s266, 64, %s268, %s254
        $region32: #{tpu_custom_call.1} parent=27 // pred_fallthru
          _
      $region28: #{tpu_custom_call.1} parent=5 // pred_fallthru
        _
      %p271 = scmp.le.s32.totalorder 1, %s18
      %p272 = scmp.lt.s32.totalorder %s18, 3
      %p273 = pnand %p271, %p272
      %p274 = pneg %p273
      // Predicated region
      $region33: #{tpu_custom_call.1} parent=5 // pred_check
        _
      $region34: #{tpu_custom_call.1} parent=5 // pred_check_branch
        %276 = sbr.rel (%p273) target = $region36
      $region35: #{tpu_custom_call.1} parent=5 // pred_region
        %s277 = ssub.s32 %s18, 1
        %s278 = sand.u32 %s61, 1
        %s279 = scalar_lea.sflag [#allocation4], %s278
        %s280 = sand.u32 %s61, 1
        %s281 = smul.addr %s280, 4
        %s282 = scalar_lea.vmem [#allocation3], %s281
        // Predicated region
        $region37: #{tpu_custom_call.1} parent=35 // pred_check
          %p283 = pneg %p74
        $region38: #{tpu_custom_call.1} parent=35 // pred_check_branch
          %285 = sbr.rel (%p283) target = $region40
        $region39: #{tpu_custom_call.1} parent=35 // pred_region
          %287 = dma.done %s279, 64
        $region40: #{tpu_custom_call.1} parent=35 // pred_fallthru
          _
        // Predicated region
        $region41: #{tpu_custom_call.1} parent=35 // pred_check
          %p288 = pneg %p102
        $region42: #{tpu_custom_call.1} parent=35 // pred_check_branch
          %290 = sbr.rel (%p288) target = $region44
        $region43: #{tpu_custom_call.1} parent=35 // pred_region
          %292 = dma.done [#allocation7], 256
        $region44: #{tpu_custom_call.1} parent=35 // pred_fallthru
          _
        // Predicated region
        $region45: #{tpu_custom_call.1} parent=35 // pred_check
          %p293 = pneg %p128
        $region46: #{tpu_custom_call.1} parent=35 // pred_check_branch
          %295 = sbr.rel (%p293) target = $region48
        $region47: #{tpu_custom_call.1} parent=35 // pred_region
          %297 = dma.done [#allocation7], 128
        $region48: #{tpu_custom_call.1} parent=35 // pred_fallthru
          _
        // Predicated region
        $region49: #{tpu_custom_call.1} parent=35 // pred_check
          %p298 = pneg %p154
        $region50: #{tpu_custom_call.1} parent=35 // pred_check_branch
          %300 = sbr.rel (%p298) target = $region52
        $region51: #{tpu_custom_call.1} parent=35 // pred_region
          %302 = dma.done [#allocation10], 128
        $region52: #{tpu_custom_call.1} parent=35 // pred_fallthru
          _
        %s303 = sand.u32 %s61, 1
        %s304 = scalar_lea.sflag [#allocation4], %s303
        %s305 = sand.u32 %s61, 1
        %s306 = smul.addr %s305, 4
        %s307 = scalar_lea.vmem [#allocation3], %s306
        %p308 = pneg %p74
        %p309 = pneg %p71
        %p310 = pneg %p102
        %p311 = pneg %p99
        %p312 = pneg %p128
        %p313 = pneg %p125
        %p314 = pneg %p154
        %p315 = pneg %p151
        %p316 = pneg %p184
        %p317 = pneg %p181
        %s318 = sand.u32 %s171, 1
        %s319 = scalar_lea.sflag [#allocation5], %s318
        %s320 = sand.u32 %s171, 1
        %s321 = smul.addr %s320, 16
        %s322 = scalar_lea.vmem [#allocation11], %s321
        %s323 = smul.u32 4, %s32
        %s324 = smul.u32 4, %s30
        %p326 = scmp.eq.s32.totalorder %s32, 0
        // Predicated region
        $region53: #{tpu_custom_call.1} parent=35 // pred_check
          %p327 = pneg %p326
        $region54: #{tpu_custom_call.1} parent=35 // pred_check_branch
          %329 = sbr.rel (%p327) target = $region56
        $region55: #{tpu_custom_call.1} parent=35 // pred_region
          %vm330 = vcmask 261120
          %331 = vst.msk [vmem:[#allocation2] sm:$0xff] %vm330, 0.0
        $region56: #{tpu_custom_call.1} parent=35 // pred_fallthru
          _
        %v332 = vld [vmem:[#allocation2] sm:$0xff]
        %v333 = vld [vmem:[%s282] sm:$0xf]
        %v334 = vld [vmem:[#allocation6] sm:$0xf]
        %v335 = vld [vmem:[#allocation6 + $0x4] sm:$0xf]
        %v336 = vld [vmem:[#allocation6 + $0x8] sm:$0xf]
        %v337 = vld [vmem:[#allocation6 + $0xc] sm:$0xf]
        %v342 = vunpack.c.l.b16 %v334
        %v343 = vunpack.c.l.b16 %v335
        %v344 = vunpack.c.l.b16 %v336
        %v345 = vunpack.c.l.b16 %v337
        %v346 = vpack.c.b16 %v343, %v342
        %v347 = vpack.c.b16 %v345, %v344
        %vm350 = vcmask 261120
        %v352 = vsel %vm350, %v333, 0
        %354 = vmatpush.bf16.msra.mxu0 0
        %355 = vmatpush.bf16.msra.mxu0 0
        %356 = vmatpush.bf16.msra.mxu0 0
        %357 = vmatpush.bf16.msra.mxu0 0
        %358 = vmatpush.bf16.msra.mxu0 0
        %359 = vmatpush.bf16.msra.mxu0 0
        %360 = vmatpush.bf16.msra.mxu0 %v347
        %361 = vmatpush.bf16.msra.mxu0 %v346
        %362 = vmatmul.bf16.gmra.mxu0 %v352
        %v363 = vpop.f32.mrf.mxu0
        %v364 = vadd.f32 0.0, %v363
        %v365 = vpop.f32.mrf.mxu0
        %366 = vdwg.mxu0
        %v367 = vadd.f32 %v332, %v364
        %368 = vst.msk [vmem:[#allocation2] sm:$0xff] %vm350, %v367
        // Predicated region
        $region57: #{tpu_custom_call.1} parent=35 // pred_check
          %p369 = pneg %p326
        $region58: #{tpu_custom_call.1} parent=35 // pred_check_branch
          %371 = sbr.rel (%p369) target = $region60
        $region59: #{tpu_custom_call.1} parent=35 // pred_region
          %v372 = vld [vmem:[#allocation2] sm:$0xff]
          %v373 = vld [vmem:[#allocation8] sm:$0xff]
          %v374 = vld [vmem:[#allocation9] sm:$0xff]
          %376 = vrot.lane.b32.xlu0 %v372, 124
          %v377 = vpop.permute.xlu0 %376
          %379 = vrot.lane.b32.xlu0 %v372, 4
          %v380 = vpop.permute.xlu0 %379
          %vm382 = vcmask 31744
          %v383 = vsel %vm382, %v377, %v380
          %v384 = vmul.f32 %v372, %v373
          %v385 = vmul.f32 %v383, %v374
          %v386 = vadd.f32 %v384, %v385
          %v387 = vpack.c.bf16 %v386, %v386
          %vm388 = vcmask 60416
          %389 = vst.msk [vmem:[%s322] sm:$0xf] %vm388, %v387
          %390 = vrot.lane.b32.xlu0 %v372, 116
          %v391 = vpop.permute.xlu0 %390
          %v393 = vsel %vm382, %v391, %v377
          %395 = vrot.lane.b32.xlu0 %v373, 8
          %v396 = vpop.permute.xlu0 %395
          %v398 = vmul.f32 %v372, %v396
          %v399 = vmul.f32 %v393, %v374
          %401 = vrot.lane.b32.xlu0 %v399, 8
          %v402 = vpop.permute.xlu0 %401
          %v404 = vadd.f32 %v398, %v402
          %v405 = vpack.c.bf16 %v404, %v404
          %407 = vrot.lane.b32.xlu0 %v405, 120
          %v408 = vpop.permute.xlu0 %407
          %s410 = scalar_lea.vmem %s322, 4 [#allocation11]
          %411 = vst.msk [vmem:[%s410] sm:$0xf] %vm388, %v408
          %412 = vrot.lane.b32.xlu0 %v372, 108
          %v413 = vpop.permute.xlu0 %412
          %v415 = vsel %vm382, %v413, %v391
          %416 = vrot.lane.b32.xlu0 %v373, 16
          %v417 = vpop.permute.xlu0 %416
          %v419 = vmul.f32 %v372, %v417
          %v420 = vmul.f32 %v415, %v374
          %422 = vrot.lane.b32.xlu0 %v420, 16
          %v423 = vpop.permute.xlu0 %422
          %v425 = vadd.f32 %v419, %v423
          %v426 = vpack.c.bf16 %v425, %v425
          %428 = vrot.lane.b32.xlu0 %v426, 112
          %v429 = vpop.permute.xlu0 %428
          %s431 = scalar_lea.vmem %s322, 8 [#allocation11]
          %432 = vst.msk [vmem:[%s431] sm:$0xf] %vm388, %v429
          %433 = vrot.lane.b32.xlu0 %v372, 100
          %v434 = vpop.permute.xlu0 %433
          %v436 = vsel %vm382, %v434, %v413
          %437 = vrot.lane.b32.xlu0 %v373, 24
          %v438 = vpop.permute.xlu0 %437
          %v440 = vmul.f32 %v372, %v438
          %v441 = vmul.f32 %v436, %v374
          %443 = vrot.lane.b32.xlu0 %v441, 24
          %v444 = vpop.permute.xlu0 %443
          %v446 = vadd.f32 %v440, %v444
          %v447 = vpack.c.bf16 %v446, %v446
          %449 = vrot.lane.b32.xlu0 %v447, 104
          %v450 = vpop.permute.xlu0 %449
          %s452 = scalar_lea.vmem %s322, 12 [#allocation11]
          %453 = vst.msk [vmem:[%s452] sm:$0xf] %vm388, %v450
        $region60: #{tpu_custom_call.1} parent=35 // pred_fallthru
          _
        %s454 = sand.u32 %s171, 1
        %s455 = scalar_lea.sflag [#allocation5], %s454
        %s456 = sand.u32 %s171, 1
        %s457 = smul.addr %s456, 16
        %s458 = scalar_lea.vmem [#allocation11], %s457
        // Predicated region
        $region61: #{tpu_custom_call.1} parent=35 // pred_check
          %p459 = pneg %p181
        $region62: #{tpu_custom_call.1} parent=35 // pred_check_branch
          %461 = sbr.rel (%p459) target = $region64
        $region63: #{tpu_custom_call.1} parent=35 // pred_region
          %s462 = smul.u32 4, %s30
          %464 = vsyncadd %s455, 0
          %s465 = sadd.s32 %s31, %s462
          %s466 = smul.addr %s29, 4
          %s467 = sadd.s32 %s465, %s466
          %s468 = smul.addr %s467, 4
          %s469 = scalar_lea.hbm %s4, %s468
          %s470 = sshll.u32 %s458, 4
          %s471 = int_to_ptr.vmem [resolvable:$true] %s470
          %s472 = sshll.u32 %s469, 4
          %s473 = int_to_ptr.hbm [resolvable:$true] %s472
          %478 = dma.vmem_to_hbm [thread:$0]  %s471, 256, %s473, %s455, 64, 64, 4
        $region64: #{tpu_custom_call.1} parent=35 // pred_fallthru
          _
      $region36: #{tpu_custom_call.1} parent=5 // pred_fallthru
        _
      %p479 = scmp.le.s32.totalorder 2, %s18
      // Predicated region
      $region65: #{tpu_custom_call.1} parent=5 // pred_check
        %p480 = pneg %p479
      $region66: #{tpu_custom_call.1} parent=5 // pred_check_branch
        %482 = sbr.rel (%p480) target = $region68
      $region67: #{tpu_custom_call.1} parent=5 // pred_region
        %s483 = ssub.s32 %s18, 2
        // Predicated region
        $region69: #{tpu_custom_call.1} parent=67 // pred_check
          %p484 = pneg %p187
        $region70: #{tpu_custom_call.1} parent=67 // pred_check_branch
          %486 = sbr.rel (%p484) target = $region72
        $region71: #{tpu_custom_call.1} parent=67 // pred_region
          %s487 = sand.u32 %s172, 1
          %s488 = scalar_lea.sflag [#allocation5], %s487
          %s489 = sand.u32 %s172, 1
          %s490 = smul.addr %s489, 16
          %s491 = scalar_lea.vmem [#allocation11], %s490
          %493 = dma.done %s488, 256
        $region72: #{tpu_custom_call.1} parent=67 // pred_fallthru
          _
      $region68: #{tpu_custom_call.1} parent=5 // pred_fallthru
        _
    $region6: #{tpu_custom_call.1} parent=1 // loop_footer
      %s22 = sadd.s32 1, %s18
    $region7: #{tpu_custom_call.1} parent=1 // loop_footer_branch
      %17 = sbr.rel target = $region3
    $region8: #{tpu_custom_call.1} parent=1 // loop_exit
      _
    %494 = vsyncpa [#allocation4], 1
    %s495 = scalar_lea.sflag [#allocation4], 1
    %496 = vsyncpa %s495, 1
    %497 = vsyncpa [#allocation7], 1
    %498 = vsyncpa [#allocation10], 1
    %499 = vsyncpa [#allocation5], 1
    %s500 = scalar_lea.sflag [#allocation5], 1
    %501 = vsyncpa %s500, 1

</llo_original>
